<compile_context>
chip_gen: v7x
topology: tpu7x:2x2x1
jax: 0.10.0
libtpu: 0.0.40
codegen_flags: <defaults>
</compile_context>

<pallas_src>
import functools
import math

import jax
import jax.numpy as jnp
from jax.experimental import pallas as pl
from jax.experimental.pallas import tpu as pltpu


def _retention_kernel(last_ref, qa_ref, qb_ref, kc_ref, v_ref,
                      out_ref, acc_re, acc_im,
                      *, tq, tk, log_gamma):
    qi = pl.program_id(1)
    ki = pl.program_id(2)

    # Init accumulators at the start of each key sweep.
    @pl.when(ki == 0)
    def _():
        acc_re[...] = jnp.zeros_like(acc_re)
        acc_im[...] = jnp.zeros_like(acc_im)

    # Compute only key blocks at or below the causal diagonal.
    @pl.when(ki <= last_ref[qi])
    def _():
        qa = qa_ref[...]          # (tq, 2H) = [Q_re, -Q_im]
        qb = qb_ref[...]          # (tq, 2H) = [Q_im,  Q_re]
        kc = kc_ref[...]          # (tk, 2H) = [K_re,  K_im]
        v = v_ref[...]            # (tk, H)

        # Complex score tile with two real matmuls (contraction over 2H):
        #   att_re = Qr.Kr - Qi.Ki ; att_im = Qr.Ki + Qi.Kr
        dn = (((1,), (1,)), ((), ()))   # contract last axis of both operands
        att_re = jax.lax.dot_general(qa, kc, dn,
                                     preferred_element_type=jnp.float32)
        att_im = jax.lax.dot_general(qb, kc, dn,
                                     preferred_element_type=jnp.float32)

        # Blockwise decay mask: D[n,m] = gamma^(n-m) for n>=m, else 0.
        row = jax.lax.broadcasted_iota(jnp.int32, (tq, tk), 0)
        col = jax.lax.broadcasted_iota(jnp.int32, (tq, tk), 1)
        diff = (qi * tq - ki * tk) + row - col
        mask = diff >= 0
        expo = jnp.where(mask, diff, 0).astype(jnp.float32) * log_gamma
        d = jnp.where(mask, jnp.exp(expo), 0.0)

        # S1 tile = (att * D) @ V   (V is purely real) -- accumulate over key blocks.
        acc_re[...] += jnp.dot(att_re * d, v, preferred_element_type=jnp.float32)
        acc_im[...] += jnp.dot(att_im * d, v, preferred_element_type=jnp.float32)

    # One lane-dense packed (real | imag) store per query tile.
    @pl.when(ki == pl.num_programs(2) - 1)
    def _():
        out_ref[...] = jnp.concatenate([acc_re[...], acc_im[...]], axis=-1)


def _pick_tile(S, target):
    """Largest multiple-of-8 divisor of S that is <= target (or S itself)."""
    if S <= target:
        return S
    t = (target // 8) * 8
    while t >= 8:
        if S % t == 0:
            return t
        t -= 8
    return S


def _vmem_budget_bytes(tq, tk, H):
    f32 = 4
    live = 0
    live += 2 * 2 * tq * 2 * H * f32          # qa + qb tiles (double-buffered)
    live += 2 * (tk * 2 * H + tk * H) * f32   # kc + V tiles (double-buffered)
    live += 2 * tq * 2 * H * f32              # packed output block
    live += 2 * tq * H * f32                  # acc_re / acc_im scratch
    live += 8 * tq * tk * f32                 # score / decay temporaries
    return live


@functools.partial(jax.jit, static_argnames=("gamma",))
def simple_retention_forward(X, Z, W_Q, W_K, W_V, theta, gamma):
    """Pallas implementation of SimpleRetention.forward (parallel form).

    X, Z: (B, S, H) float32.  Returns (B, S, H) complex64.
    """
    B, S, H = X.shape

    # Hoisted projections (trivial next to the O(S^2*H) retention work).
    A = jnp.einsum("bsh,hk->bsk", X, W_Q)
    Bk = jnp.einsum("bsh,hk->bsk", Z, W_K)
    V = jnp.einsum("bsh,hk->bsk", Z, W_V)

    # Theta[n, h] = exp(i * (n+1) * theta[h]) -> cos / sin tables (glue).
    ns = jnp.arange(1, S + 1, dtype=jnp.float32)[:, None]      # (S, 1)
    phase = ns * theta[None, :]                                  # (S, H)
    cos_t = jnp.cos(phase)[None]                                 # (1, S, H)
    sin_t = jnp.sin(phase)[None]

    q_re = A * cos_t
    q_im = A * sin_t
    k_re = Bk * cos_t
    k_im = -(Bk * sin_t)        # K = (Z W_K) * conj(Theta)

    qa = jnp.concatenate([q_re, -q_im], axis=-1)   # (B, S, 2H)
    qb = jnp.concatenate([q_im, q_re], axis=-1)    # (B, S, 2H)
    kc = jnp.concatenate([k_re, k_im], axis=-1)    # (B, S, 2H)

    tq = _pick_tile(S, 256)
    tk = _pick_tile(S, 512 if H <= 256 else 256)
    nq = S // tq
    nk = S // tk
    log_gamma = math.log(gamma)

    # Per-query-tile last needed key-block index (scalar-prefetched into SMEM).
    last_needed = ((jnp.arange(nq, dtype=jnp.int32) * tq) + (tq - 1)) // tk

    kernel = functools.partial(_retention_kernel, tq=tq, tk=tk,
                               log_gamma=log_gamma)

    def q_map(b, qi, ki, last_ref):
        return (b, qi, 0)

    def kv_map(b, qi, ki, last_ref):
        # Clamp above-diagonal key blocks to the last needed one: repeated block
        # index => Pallas elides the redundant DMA; the body is skipped anyway.
        return (b, jnp.minimum(ki, last_ref[qi]), 0)

    grid_spec = pltpu.PrefetchScalarGridSpec(
        num_scalar_prefetch=1,
        grid=(B, nq, nk),
        in_specs=[
            pl.BlockSpec((pl.Squeezed(), tq, 2 * H), q_map),   # qa
            pl.BlockSpec((pl.Squeezed(), tq, 2 * H), q_map),   # qb
            pl.BlockSpec((pl.Squeezed(), tk, 2 * H), kv_map),  # kc
            pl.BlockSpec((pl.Squeezed(), tk, H), kv_map),      # V
        ],
        out_specs=pl.BlockSpec((pl.Squeezed(), tq, 2 * H), q_map),
        scratch_shapes=[
            pltpu.VMEM((tq, H), jnp.float32),   # acc_re
            pltpu.VMEM((tq, H), jnp.float32),   # acc_im
        ],
    )

    vmem_limit = min(max(int(1.5 * _vmem_budget_bytes(tq, tk, H)), 16 << 20),
                     48 << 20)

    cost = pl.CostEstimate(
        flops=int(6 * B * S * S * H),                  # causal ~half of 12*B*S^2*H
        transcendentals=int(B * S * S) // 2 + 1,       # exp() in the decay mask
        bytes_accessed=int(4 * B * S * H * (4 + 3 * nq + 2)),
    )

    packed = pl.pallas_call(
        kernel,
        out_shape=jax.ShapeDtypeStruct((B, S, 2 * H), jnp.float32),
        grid_spec=grid_spec,
        compiler_params=pltpu.CompilerParams(
            dimension_semantics=("parallel", "parallel", "arbitrary"),
            vmem_limit_bytes=vmem_limit),
        cost_estimate=cost,
    )(last_needed, qa, qb, kc, V)

    return jax.lax.complex(packed[..., :H], packed[..., H:])


def _get_D(sequence_length: int, gamma: float) -> jnp.ndarray:
    n = jnp.arange(sequence_length, dtype=jnp.float32)[:, None]
    m = jnp.arange(sequence_length, dtype=jnp.float32)[None, :]
    D = (gamma ** (n - m)) * (n >= m).astype(jnp.float32)
    return jnp.where(jnp.isnan(D), 0.0, D)


def _reference_forward(X, Z, W_Q, W_K, W_V, theta, gamma):
    """Pure-JAX complex64 reference mirroring the PyTorch forward."""
    B, S, H = X.shape
    ctype = jnp.complex64
    Xc = X.astype(ctype)
    Zc = Z.astype(ctype)
    ns = jnp.arange(1, S + 1, dtype=jnp.float32)[:, None]
    Theta = jnp.exp(1j * (ns * theta[None, :]).astype(ctype))           # (S, H)
    Theta_bar = jnp.conj(Theta)
    D = _get_D(S, gamma).astype(ctype)
    Q = (Xc @ W_Q.astype(ctype)) * Theta[None]
    K = (Zc @ W_K.astype(ctype)) * Theta_bar[None]
    V = Zc @ W_V.astype(ctype)
    att = jnp.einsum("bnh,bmh->bnm", Q, K) * D[None]
    return att @ V


if __name__ == "__main__":
    # Deterministic synthetic parameters / inputs.
    B, S, H = 2, 8, 32
    gamma = 0.9
    key = jax.random.PRNGKey(0)
    k_x, k_z, k_q, k_k, k_v, k_t = jax.random.split(key, 6)

    X = jax.random.normal(k_x, (B, S, H), dtype=jnp.float32)
    Z = jax.random.normal(k_z, (B, S, H), dtype=jnp.float32)
    W_Q = jax.random.normal(k_q, (H, H), dtype=jnp.float32) / H
    W_K = jax.random.normal(k_k, (H, H), dtype=jnp.float32) / H
    W_V = jax.random.normal(k_v, (H, H), dtype=jnp.float32) / H
    theta = jax.random.normal(k_t, (H,), dtype=jnp.float32) / H

    out = simple_retention_forward(X, Z, W_Q, W_K, W_V, theta, gamma=gamma)
    out = jax.block_until_ready(out)

    ref = jax.block_until_ready(
        _reference_forward(X, Z, W_Q, W_K, W_V, theta, gamma))

    assert out.shape == (B, S, H) and out.dtype == jnp.complex64
    assert jnp.allclose(out, ref, atol=1e-4, rtol=1e-4)
    print("KERNEL_OK")
</pallas_src>

<mosaic_0001>
module attributes {stable_mosaic.version = 11 : i64} {
  func.func @_retention_kernel(%arg0: i32, %arg1: i32, %arg2: i32, %arg3: memref<1xi32, #tpu.memory_space<smem>>, %arg4: memref<1x8x64xf32, #tpu.memory_space<vmem>>, %arg5: memref<1x8x64xf32, #tpu.memory_space<vmem>>, %arg6: memref<1x8x64xf32, #tpu.memory_space<vmem>>, %arg7: memref<1x8x32xf32, #tpu.memory_space<vmem>>, %arg8: memref<1x8x64xf32, #tpu.memory_space<vmem>>, %arg9: memref<8x32xf32, #tpu.memory_space<vmem>>, %arg10: memref<8x32xf32, #tpu.memory_space<vmem>>) attributes {dimension_semantics = [#tpu.dimension_semantics<parallel>, #tpu.dimension_semantics<parallel>, #tpu.dimension_semantics<arbitrary>], iteration_bounds = array<i64: 2, 1, 1>, scalar_prefetch = 1 : i64, scratch_operands = 2 : i64, tpu.core_type = #tpu.core_type<tc>, window_params = [{transform_indices = @transform_0, window_bounds = array<i64: 1, 8, 64>}, {transform_indices = @transform_1, window_bounds = array<i64: 1, 8, 64>}, {transform_indices = @transform_2, window_bounds = array<i64: 1, 8, 64>}, {transform_indices = @transform_3, window_bounds = array<i64: 1, 8, 32>}, {transform_indices = @transform_4, window_bounds = array<i64: 1, 8, 64>}]} {
    %c0_i32 = arith.constant 0 : i32
    %0 = arith.cmpi eq, %arg2, %c0_i32 : i32
    %1 = arith.extui %0 : i1 to i32
    %c0_i32_0 = arith.constant 0 : i32
    %2 = arith.cmpi ne, %1, %c0_i32_0 : i32
    scf.if %2 {
      %cst = arith.constant 0.000000e+00 : f32
      %11 = vector.broadcast %cst : f32 to vector<8x32xf32>
      %c0 = arith.constant 0 : index
      %c0_4 = arith.constant 0 : index
      %12 = vector.load %arg9[%c0, %c0_4] : memref<8x32xf32, #tpu.memory_space<vmem>>, vector<8x32xf32>
      tpu.vector_store %arg9[%c0, %c0_4], %11 {strides = array<i32>} : memref<8x32xf32, #tpu.memory_space<vmem>>, vector<8x32xf32>,
      %cst_5 = arith.constant 0.000000e+00 : f32
      %13 = vector.broadcast %cst_5 : f32 to vector<8x32xf32>
      %c0_6 = arith.constant 0 : index
      %c0_7 = arith.constant 0 : index
      %14 = vector.load %arg10[%c0_6, %c0_7] : memref<8x32xf32, #tpu.memory_space<vmem>>, vector<8x32xf32>
      tpu.vector_store %arg10[%c0_6, %c0_7], %13 {strides = array<i32>} : memref<8x32xf32, #tpu.memory_space<vmem>>, vector<8x32xf32>,
    } else {
    }
    %3 = arith.index_cast %arg1 : i32 to index
    %4 = memref.load %arg3[%3] : memref<1xi32, #tpu.memory_space<smem>>
    %5 = arith.cmpi sle, %arg2, %4 : i32
    %6 = arith.extui %5 : i1 to i32
    %c0_i32_1 = arith.constant 0 : i32
    %7 = arith.cmpi ne, %6, %c0_i32_1 : i32
    scf.if %7 {
      %c0 = arith.constant 0 : index
      %c0_4 = arith.constant 0 : index
      %c0_5 = arith.constant 0 : index
      %11 = vector.load %arg4[%c0, %c0_4, %c0_5] : memref<1x8x64xf32, #tpu.memory_space<vmem>>, vector<1x8x64xf32>
      %12 = vector.shape_cast %11 : vector<1x8x64xf32> to vector<8x64xf32>
      %c0_6 = arith.constant 0 : index
      %c0_7 = arith.constant 0 : index
      %c0_8 = arith.constant 0 : index
      %13 = vector.load %arg5[%c0_6, %c0_7, %c0_8] : memref<1x8x64xf32, #tpu.memory_space<vmem>>, vector<1x8x64xf32>
      %14 = vector.shape_cast %13 : vector<1x8x64xf32> to vector<8x64xf32>
      %c0_9 = arith.constant 0 : index
      %c0_10 = arith.constant 0 : index
      %c0_11 = arith.constant 0 : index
      %15 = vector.load %arg6[%c0_9, %c0_10, %c0_11] : memref<1x8x64xf32, #tpu.memory_space<vmem>>, vector<1x8x64xf32>
      %16 = vector.shape_cast %15 : vector<1x8x64xf32> to vector<8x64xf32>
      %c0_12 = arith.constant 0 : index
      %c0_13 = arith.constant 0 : index
      %c0_14 = arith.constant 0 : index
      %17 = vector.load %arg7[%c0_12, %c0_13, %c0_14] : memref<1x8x32xf32, #tpu.memory_space<vmem>>, vector<1x8x32xf32>
      %18 = vector.shape_cast %17 : vector<1x8x32xf32> to vector<8x32xf32>
      %cst = arith.constant dense<0.000000e+00> : vector<8x8xf32>
      %19 = tpu.matmul %12, %16, %cst {dimension_numbers = #tpu.dot_dimension_numbers<[1], [1], [0], [0], [0, 0, 1, 0], [], []>} : vector<8x64xf32>, vector<8x64xf32>, vector<8x8xf32> -> vector<8x8xf32>
      %cst_15 = arith.constant dense<0.000000e+00> : vector<8x8xf32>
      %20 = tpu.matmul %14, %16, %cst_15 {dimension_numbers = #tpu.dot_dimension_numbers<[1], [1], [0], [0], [0, 0, 1, 0], [], []>} : vector<8x64xf32>, vector<8x64xf32>, vector<8x8xf32> -> vector<8x8xf32>
      %21 = tpu.iota {dimensions = array<i32: 0>} : vector<8x8xi32>
      %22 = tpu.iota {dimensions = array<i32: 1>} : vector<8x8xi32>
      %c8_i32 = arith.constant 8 : i32
      %23 = arith.muli %arg1, %c8_i32 : i32
      %c8_i32_16 = arith.constant 8 : i32
      %24 = arith.muli %arg2, %c8_i32_16 : i32
      %25 = arith.subi %23, %24 : i32
      %26 = vector.broadcast %25 : i32 to vector<8x8xi32>
      %27 = arith.addi %26, %21 : vector<8x8xi32>
      %28 = arith.subi %27, %22 : vector<8x8xi32>
      %c0_i32_17 = arith.constant 0 : i32
      %29 = vector.broadcast %c0_i32_17 : i32 to vector<8x8xi32>
      %30 = arith.cmpi sge, %28, %29 : vector<8x8xi32>
      %c0_i32_18 = arith.constant 0 : i32
      %31 = vector.broadcast %c0_i32_18 : i32 to vector<8x8xi32>
      %32 = arith.select %30, %28, %31 : vector<8x8xi1>, vector<8x8xi32>
      %33 = arith.sitofp %32 : vector<8x8xi32> to vector<8x8xf32>
      %cst_19 = arith.constant -0.105360515 : f32
      %34 = vector.broadcast %cst_19 : f32 to vector<8x8xf32>
      %35 = arith.mulf %33, %34 : vector<8x8xf32>
      %36 = math.exp %35 : vector<8x8xf32>
      %cst_20 = arith.constant 0.000000e+00 : f32
      %37 = vector.broadcast %cst_20 : f32 to vector<8x8xf32>
      %38 = arith.select %30, %36, %37 : vector<8x8xi1>, vector<8x8xf32>
      %c0_21 = arith.constant 0 : index
      %c0_22 = arith.constant 0 : index
      %39 = vector.load %arg9[%c0_21, %c0_22] : memref<8x32xf32, #tpu.memory_space<vmem>>, vector<8x32xf32>
      %40 = arith.mulf %19, %38 : vector<8x8xf32>
      %cst_23 = arith.constant dense<0.000000e+00> : vector<8x32xf32>
      %41 = tpu.matmul %40, %18, %cst_23 {dimension_numbers = #tpu.dot_dimension_numbers<[1], [0], [0], [1], [0, 0, 1, 1], [], []>} : vector<8x8xf32>, vector<8x32xf32>, vector<8x32xf32> -> vector<8x32xf32>
      %42 = arith.addf %39, %41 : vector<8x32xf32>
      %c0_24 = arith.constant 0 : index
      %c0_25 = arith.constant 0 : index
      %43 = vector.load %arg9[%c0_24, %c0_25] : memref<8x32xf32, #tpu.memory_space<vmem>>, vector<8x32xf32>
      tpu.vector_store %arg9[%c0_24, %c0_25], %42 {strides = array<i32>} : memref<8x32xf32, #tpu.memory_space<vmem>>, vector<8x32xf32>,
      %c0_26 = arith.constant 0 : index
      %c0_27 = arith.constant 0 : index
      %44 = vector.load %arg10[%c0_26, %c0_27] : memref<8x32xf32, #tpu.memory_space<vmem>>, vector<8x32xf32>
      %45 = arith.mulf %20, %38 : vector<8x8xf32>
      %cst_28 = arith.constant dense<0.000000e+00> : vector<8x32xf32>
      %46 = tpu.matmul %45, %18, %cst_28 {dimension_numbers = #tpu.dot_dimension_numbers<[1], [0], [0], [1], [0, 0, 1, 1], [], []>} : vector<8x8xf32>, vector<8x32xf32>, vector<8x32xf32> -> vector<8x32xf32>
      %47 = arith.addf %44, %46 : vector<8x32xf32>
      %c0_29 = arith.constant 0 : index
      %c0_30 = arith.constant 0 : index
      %48 = vector.load %arg10[%c0_29, %c0_30] : memref<8x32xf32, #tpu.memory_space<vmem>>, vector<8x32xf32>
      tpu.vector_store %arg10[%c0_29, %c0_30], %47 {strides = array<i32>} : memref<8x32xf32, #tpu.memory_space<vmem>>, vector<8x32xf32>,
    } else {
    }
    %c0_i32_2 = arith.constant 0 : i32
    %8 = arith.cmpi eq, %arg2, %c0_i32_2 : i32
    %9 = arith.extui %8 : i1 to i32
    %c0_i32_3 = arith.constant 0 : i32
    %10 = arith.cmpi ne, %9, %c0_i32_3 : i32
    scf.if %10 {
      %c0 = arith.constant 0 : index
      %c0_4 = arith.constant 0 : index
      %11 = vector.load %arg9[%c0, %c0_4] : memref<8x32xf32, #tpu.memory_space<vmem>>, vector<8x32xf32>
      %c0_5 = arith.constant 0 : index
      %c0_6 = arith.constant 0 : index
      %12 = vector.load %arg10[%c0_5, %c0_6] : memref<8x32xf32, #tpu.memory_space<vmem>>, vector<8x32xf32>
      %13 = tpu.concatenate %11, %12 in 1 : vector<8x32xf32>, vector<8x32xf32> -> vector<8x64xf32>
      %c0_7 = arith.constant 0 : index
      %c0_8 = arith.constant 0 : index
      %c0_9 = arith.constant 0 : index
      %14 = vector.load %arg8[%c0_7, %c0_8, %c0_9] : memref<1x8x64xf32, #tpu.memory_space<vmem>>, vector<1x8x64xf32>
      %15 = vector.shape_cast %14 : vector<1x8x64xf32> to vector<8x64xf32>
      %16 = vector.shape_cast %13 : vector<8x64xf32> to vector<1x8x64xf32>
      tpu.vector_store %arg8[%c0_7, %c0_8, %c0_9], %16 {strides = array<i32>} : memref<1x8x64xf32, #tpu.memory_space<vmem>>, vector<1x8x64xf32>,
    } else {
    }
    return
  }
  func.func @transform_0(%arg0: i32, %arg1: i32, %arg2: i32, %arg3: memref<1xi32, #tpu.memory_space<smem>>) -> (i32, i32, i32) {
    %c0_i32 = arith.constant 0 : i32
    %c0_i32_0 = arith.constant 0 : i32
    return %arg0, %arg1, %c0_i32 : i32, i32, i32
  }
  func.func @transform_1(%arg0: i32, %arg1: i32, %arg2: i32, %arg3: memref<1xi32, #tpu.memory_space<smem>>) -> (i32, i32, i32) {
    %c0_i32 = arith.constant 0 : i32
    %c0_i32_0 = arith.constant 0 : i32
    return %arg0, %arg1, %c0_i32 : i32, i32, i32
  }
  func.func @transform_2(%arg0: i32, %arg1: i32, %arg2: i32, %arg3: memref<1xi32, #tpu.memory_space<smem>>) -> (i32, i32, i32) {
    %0 = arith.index_cast %arg1 : i32 to index
    %1 = memref.load %arg3[%0] : memref<1xi32, #tpu.memory_space<smem>>
    %2 = arith.minsi %arg2, %1 : i32
    %c0_i32 = arith.constant 0 : i32
    %c0_i32_0 = arith.constant 0 : i32
    return %arg0, %2, %c0_i32 : i32, i32, i32
  }
  func.func @transform_3(%arg0: i32, %arg1: i32, %arg2: i32, %arg3: memref<1xi32, #tpu.memory_space<smem>>) -> (i32, i32, i32) {
    %0 = arith.index_cast %arg1 : i32 to index
    %1 = memref.load %arg3[%0] : memref<1xi32, #tpu.memory_space<smem>>
    %2 = arith.minsi %arg2, %1 : i32
    %c0_i32 = arith.constant 0 : i32
    %c0_i32_0 = arith.constant 0 : i32
    return %arg0, %2, %c0_i32 : i32, i32, i32
  }
  func.func @transform_4(%arg0: i32, %arg1: i32, %arg2: i32, %arg3: memref<1xi32, #tpu.memory_space<smem>>) -> (i32, i32, i32) {
    %c0_i32 = arith.constant 0 : i32
    %c0_i32_0 = arith.constant 0 : i32
    return %arg0, %arg1, %c0_i32 : i32, i32, i32
  }
}

</mosaic_0001>

<llo_original>
// kernel: custom-call
$region0: #{custom-call}
  %s0 = inlined_call_operand.vmem [shape: f32[2,8,32], index: 0, kind: input, shape index: {}]
  %s1 = inlined_call_operand.vmem [shape: f32[2,8,32], index: 1, kind: input, shape index: {}]
  %s2 = inlined_call_operand.hbm [shape: c64[2,8,32], index: 2, kind: output, shape index: {}]
  %s3 = scalar_lea.hbm %s2, 256
  $region1: #{custom-call} parent=0
    #allocation0 [shape = 's32[1]{0}', space=sflag, size = 0x4, scoped, tag = 'scoped memory for custom-call']
    %4 = vsyncpa [#allocation0], 0
    %s5 = sshll.u32 %s0, 4
    %s6 = int_to_ptr.vmem [resolvable:$true] %s5
    %8 = dma.vmem_to_hbm [thread:$0]  %s6, 256, %s2, [#allocation0]
    %9 = dma.done [#allocation0], 256
    %10 = vsyncpa [#allocation0], 1
  $region2: #{custom-call} parent=0
    #allocation1 [shape = 's32[1]{0}', space=sflag, size = 0x4, scoped, tag = 'scoped memory for custom-call']
    %11 = vsyncpa [#allocation1], 0
    %s12 = sshll.u32 %s1, 4
    %s13 = int_to_ptr.vmem [resolvable:$true] %s12
    %15 = dma.vmem_to_hbm [thread:$0]  %s13, 256, %s3, [#allocation1]
    %16 = dma.done [#allocation1], 256
    %17 = vsyncpa [#allocation1], 1

// kernel: simple_retention_forward.1
$region0: #{simple_retention_forward.1}
  #allocation0 [shape = 'u32[]', space=smem, size = 0x4, offset = 0x4, fixed_abs, tag = 'smem constant byte address 0x4 - core index']
  #allocation1 [shape = 'u32[144,128]{1,0:T(1,128)}', space=vmem, size = 0x12000, scoped, tag = 'internal scratch']
  #allocation2 [shape = 'f32[8,32]{1,0:T(8,128)}', space=vmem, size = 0x1000, scoped, tag = 'scratch operand']
  #allocation3 [shape = 'f32[8,32]{1,0:T(8,128)}', space=vmem, size = 0x1000, scoped, tag = 'scratch operand']
  #allocation4 [shape = 's32[1]{0}', space=sflag, size = 0x4, scoped, tag = 'scoped memory for simple_retention_forward.1']
  #allocation5 [shape = 's32[1]{0:T(128)S(6)}', space=smem, size = 0x200, scoped, tag = 'prefetched SMEM operand 0']
  %s0 = inlined_call_operand.<no memory space> [shape: s32[1], index: 0, kind: input, shape index: {}]
  %s1 = inlined_call_operand.vmem [shape: f32[2,8,64], index: 1, kind: input, shape index: {}]
  %s2 = inlined_call_operand.vmem [shape: f32[2,8,64], index: 2, kind: input, shape index: {}]
  %s3 = inlined_call_operand.vmem [shape: f32[2,8,64], index: 3, kind: input, shape index: {}]
  %s4 = inlined_call_operand.vmem [shape: f32[2,8,32], index: 4, kind: input, shape index: {}]
  %s5 = inlined_call_operand.vmem [shape: f32[2,8,64], index: 5, kind: output, shape index: {}]
  %s6 = sld [smem:[#allocation0]]
  $region61: #{simple_retention_forward.1} parent=0
    _
  %s8 = ssub.s32 1, %s6
  %s9 = scalar_select 0, %s8, %s6
  %10 = sst [smem:[#allocation5]] %s0
  loop: start=0, step=1, limit=4
  $region2: #{simple_retention_forward.1} parent=0 // loop_pre_header
    _
  $region3: #{simple_retention_forward.1} parent=0 // loop_header
    %s12 = sphi 0, %s16
    %p13 = scmp.ge.s32.totalorder %s12, 4
    %s19 = sphi 0, %s38
    %s20 = sphi 0, %s34
    %s21 = sphi 0, %s30
    %s22 = sphi 0, %s19
    %s23 = sphi 0, %s20
    %s24 = sphi 0, %s21
    %s25 = sphi 0, %s22
    %s26 = sphi 0, %s23
    %s27 = sphi 0, %s24
    %s43 = sphi 0, %s45
    %s46 = sphi 0, %s43
    %s47 = sphi 0, %s46
    %s63 = sphi 0, %s47
    %s71 = sphi 0, %s73
    %s74 = sphi 0, %s71
    %s75 = sphi 0, %s74
    %s91 = sphi 0, %s75
    %s105 = sphi 0, %s107
    %s108 = sphi 0, %s105
    %s109 = sphi 0, %s108
    %s125 = sphi 0, %s109
    %s139 = sphi 0, %s141
    %s142 = sphi 0, %s139
    %s143 = sphi 0, %s142
    %s159 = sphi 0, %s143
    %s167 = sphi 0, %s169
    %s170 = sphi 0, %s167
    %s171 = sphi 0, %s170
    %s187 = sphi 0, %s171
  $region4: #{simple_retention_forward.1} parent=0 // loop_header_branch
    %15 = sbr.rel (%p13) target = $region8
  $region5: #{simple_retention_forward.1} parent=0 // loop_body
    %s17 = ssub.s32 %s12, 1
    %s18 = ssub.s32 %s12, 2
    %s28 = sadd.s32 1, %s21
    %p29 = scmp.ge.s32.totalorder %s28, 1
    %s30 = scalar_select %p29, 0, %s28
    %s31 = sadd.s32 1, %s20
    %s32 = scalar_select %p29, %s31, %s20
    %p33 = scmp.ge.s32.totalorder %s32, 1
    %s34 = scalar_select %p33, 0, %s32
    %s35 = sadd.s32 1, %s19
    %s36 = scalar_select %p33, %s35, %s19
    %p37 = scmp.ge.s32.totalorder %s36, 2
    %s38 = scalar_select %p37, 0, %s36
    %s39 = ssub.s32 %s19, %s38
    %s40 = ssub.s32 %s20, %s34
    %s41 = sor.u32 %s39, %s40
    %p42 = scmp.eq.s32.totalorder %s41, 0
    %s44 = sadd.s32 %s43, 1
    %s45 = scalar_select %p42, %s43, %s44
    %p48 = pneg %p42
    %p49 = scmp.eq.s32.totalorder %s12, 1
    %p50 = por %p48, %p49
    %p51 = scmp.ne.s32.totalorder %s43, %s46
    %p52 = scmp.eq.s32.totalorder %s12, 0
    %p53 = por %p51, %p52
    %p54 = scmp.ne.s32.totalorder %s43, %s46
    %p55 = scmp.eq.s32.totalorder %s17, 1
    %p56 = por %p54, %p55
    %p57 = scmp.ne.s32.totalorder %s46, %s47
    %p58 = scmp.eq.s32.totalorder %s17, 0
    %p59 = por %p57, %p58
    %p60 = scmp.ne.s32.totalorder %s46, %s47
    %p61 = scmp.eq.s32.totalorder %s18, 1
    %p62 = por %p60, %p61
    %p64 = scmp.ne.s32.totalorder %s47, %s63
    %p65 = scmp.eq.s32.totalorder %s18, 0
    %p66 = por %p64, %p65
    %s67 = ssub.s32 %s19, %s38
    %s68 = ssub.s32 %s20, %s34
    %s69 = sor.u32 %s67, %s68
    %p70 = scmp.eq.s32.totalorder %s69, 0
    %s72 = sadd.s32 %s71, 1
    %s73 = scalar_select %p70, %s71, %s72
    %p76 = pneg %p70
    %p77 = scmp.eq.s32.totalorder %s12, 1
    %p78 = por %p76, %p77
    %p79 = scmp.ne.s32.totalorder %s71, %s74
    %p80 = scmp.eq.s32.totalorder %s12, 0
    %p81 = por %p79, %p80
    %p82 = scmp.ne.s32.totalorder %s71, %s74
    %p83 = scmp.eq.s32.totalorder %s17, 1
    %p84 = por %p82, %p83
    %p85 = scmp.ne.s32.totalorder %s74, %s75
    %p86 = scmp.eq.s32.totalorder %s17, 0
    %p87 = por %p85, %p86
    %p88 = scmp.ne.s32.totalorder %s74, %s75
    %p89 = scmp.eq.s32.totalorder %s18, 1
    %p90 = por %p88, %p89
    %p92 = scmp.ne.s32.totalorder %s75, %s91
    %p93 = scmp.eq.s32.totalorder %s18, 0
    %p94 = por %p92, %p93
    %s95 = sld [smem:[#allocation5 + %s20]]
    %p96 = scmp.lt.s32.totalorder %s21, %s95
    %s97 = scalar_select %p96, %s21, %s95
    %s98 = sld [smem:[#allocation5 + %s34]]
    %p99 = scmp.lt.s32.totalorder %s30, %s98
    %s100 = scalar_select %p99, %s30, %s98
    %s101 = ssub.s32 %s19, %s38
    %s102 = ssub.s32 %s97, %s100
    %s103 = sor.u32 %s101, %s102
    %p104 = scmp.eq.s32.totalorder %s103, 0
    %s106 = sadd.s32 %s105, 1
    %s107 = scalar_select %p104, %s105, %s106
    %p110 = pneg %p104
    %p111 = scmp.eq.s32.totalorder %s12, 1
    %p112 = por %p110, %p111
    %p113 = scmp.ne.s32.totalorder %s105, %s108
    %p114 = scmp.eq.s32.totalorder %s12, 0
    %p115 = por %p113, %p114
    %p116 = scmp.ne.s32.totalorder %s105, %s108
    %p117 = scmp.eq.s32.totalorder %s17, 1
    %p118 = por %p116, %p117
    %p119 = scmp.ne.s32.totalorder %s108, %s109
    %p120 = scmp.eq.s32.totalorder %s17, 0
    %p121 = por %p119, %p120
    %p122 = scmp.ne.s32.totalorder %s108, %s109
    %p123 = scmp.eq.s32.totalorder %s18, 1
    %p124 = por %p122, %p123
    %p126 = scmp.ne.s32.totalorder %s109, %s125
    %p127 = scmp.eq.s32.totalorder %s18, 0
    %p128 = por %p126, %p127
    %s129 = sld [smem:[#allocation5 + %s20]]
    %p130 = scmp.lt.s32.totalorder %s21, %s129
    %s131 = scalar_select %p130, %s21, %s129
    %s132 = sld [smem:[#allocation5 + %s34]]
    %p133 = scmp.lt.s32.totalorder %s30, %s132
    %s134 = scalar_select %p133, %s30, %s132
    %s135 = ssub.s32 %s19, %s38
    %s136 = ssub.s32 %s131, %s134
    %s137 = sor.u32 %s135, %s136
    %p138 = scmp.eq.s32.totalorder %s137, 0
    %s140 = sadd.s32 %s139, 1
    %s141 = scalar_select %p138, %s139, %s140
    %p144 = pneg %p138
    %p145 = scmp.eq.s32.totalorder %s12, 1
    %p146 = por %p144, %p145
    %p147 = scmp.ne.s32.totalorder %s139, %s142
    %p148 = scmp.eq.s32.totalorder %s12, 0
    %p149 = por %p147, %p148
    %p150 = scmp.ne.s32.totalorder %s139, %s142
    %p151 = scmp.eq.s32.totalorder %s17, 1
    %p152 = por %p150, %p151
    %p153 = scmp.ne.s32.totalorder %s142, %s143
    %p154 = scmp.eq.s32.totalorder %s17, 0
    %p155 = por %p153, %p154
    %p156 = scmp.ne.s32.totalorder %s142, %s143
    %p157 = scmp.eq.s32.totalorder %s18, 1
    %p158 = por %p156, %p157
    %p160 = scmp.ne.s32.totalorder %s143, %s159
    %p161 = scmp.eq.s32.totalorder %s18, 0
    %p162 = por %p160, %p161
    %s163 = ssub.s32 %s19, %s38
    %s164 = ssub.s32 %s20, %s34
    %s165 = sor.u32 %s163, %s164
    %p166 = scmp.eq.s32.totalorder %s165, 0
    %s168 = sadd.s32 %s167, 1
    %s169 = scalar_select %p166, %s167, %s168
    %p172 = pneg %p166
    %p173 = scmp.eq.s32.totalorder %s12, 1
    %p174 = por %p172, %p173
    %p175 = scmp.ne.s32.totalorder %s167, %s170
    %p176 = scmp.eq.s32.totalorder %s12, 0
    %p177 = por %p175, %p176
    %p178 = scmp.ne.s32.totalorder %s167, %s170
    %p179 = scmp.eq.s32.totalorder %s17, 1
    %p180 = por %p178, %p179
    %p181 = scmp.ne.s32.totalorder %s170, %s171
    %p182 = scmp.eq.s32.totalorder %s17, 0
    %p183 = por %p181, %p182
    %p184 = scmp.ne.s32.totalorder %s170, %s171
    %p185 = scmp.eq.s32.totalorder %s18, 1
    %p186 = por %p184, %p185
    %p188 = scmp.ne.s32.totalorder %s171, %s187
    %p189 = scmp.eq.s32.totalorder %s18, 0
    %p190 = por %p188, %p189
    %p191 = scmp.le.s32.totalorder 1, %s12
    %p192 = scmp.lt.s32.totalorder %s12, 3
    %p193 = pnand %p191, %p192
    %p194 = pneg %p193
    // Predicated region
    $region9: #{simple_retention_forward.1} parent=5 // pred_check
      _
    $region10: #{simple_retention_forward.1} parent=5 // pred_check_branch
      %196 = sbr.rel (%p193) target = $region12
    $region11: #{simple_retention_forward.1} parent=5 // pred_region
      %s197 = ssub.s32 %s12, 1
    $region12: #{simple_retention_forward.1} parent=5 // pred_fallthru
      _
    %p198 = scmp.lt.s32.totalorder %s12, 2
    // Predicated region
    $region13: #{simple_retention_forward.1} parent=5 // pred_check
      %p199 = pneg %p198
    $region14: #{simple_retention_forward.1} parent=5 // pred_check_branch
      %201 = sbr.rel (%p199) target = $region16
    $region15: #{simple_retention_forward.1} parent=5 // pred_region
      // Predicated region
      $region17: #{simple_retention_forward.1} parent=15 // pred_check
        %p202 = pneg %p53
      $region18: #{simple_retention_forward.1} parent=15 // pred_check_branch
        %204 = sbr.rel (%p202) target = $region20
      $region19: #{simple_retention_forward.1} parent=15 // pred_region
        %p205 = scmp.lt.s32.totalorder %s19, 1
        %s206 = scalar_select %p205, %s19, 1
        %p207 = scmp.lt.s32.totalorder %s20, 0
        %s208 = scalar_select %p207, %s20, 0
        %s209 = sadd.s32 %s208, %s206
        %s210 = smul.addr %s209, 8
        %s211 = scalar_lea.vmem %s1, %s210
      $region20: #{simple_retention_forward.1} parent=15 // pred_fallthru
        _
      // Predicated region
      $region21: #{simple_retention_forward.1} parent=15 // pred_check
        %p212 = pneg %p81
      $region22: #{simple_retention_forward.1} parent=15 // pred_check_branch
        %214 = sbr.rel (%p212) target = $region24
      $region23: #{simple_retention_forward.1} parent=15 // pred_region
        %p215 = scmp.lt.s32.totalorder %s19, 1
        %s216 = scalar_select %p215, %s19, 1
        %p217 = scmp.lt.s32.totalorder %s20, 0
        %s218 = scalar_select %p217, %s20, 0
        %s219 = sadd.s32 %s218, %s216
        %s220 = smul.addr %s219, 8
        %s221 = scalar_lea.vmem %s2, %s220
      $region24: #{simple_retention_forward.1} parent=15 // pred_fallthru
        _
      // Predicated region
      $region25: #{simple_retention_forward.1} parent=15 // pred_check
        %p222 = pneg %p115
      $region26: #{simple_retention_forward.1} parent=15 // pred_check_branch
        %224 = sbr.rel (%p222) target = $region28
      $region27: #{simple_retention_forward.1} parent=15 // pred_region
        %s225 = sld [smem:[#allocation5 + %s20]]
        %p226 = scmp.lt.s32.totalorder %s21, %s225
        %s227 = scalar_select %p226, %s21, %s225
        %p228 = scmp.lt.s32.totalorder %s19, 1
        %s229 = scalar_select %p228, %s19, 1
        %p230 = scmp.lt.s32.totalorder %s227, 0
        %s231 = scalar_select %p230, %s227, 0
        %s232 = sadd.s32 %s231, %s229
        %s233 = smul.addr %s232, 8
        %s234 = scalar_lea.vmem %s3, %s233
        %s235 = sld [smem:[#allocation5 + %s20]]
        %p236 = scmp.lt.s32.totalorder %s21, %s235
        %s237 = scalar_select %p236, %s21, %s235
      $region28: #{simple_retention_forward.1} parent=15 // pred_fallthru
        _
      // Predicated region
      $region29: #{simple_retention_forward.1} parent=15 // pred_check
        %p238 = pneg %p149
      $region30: #{simple_retention_forward.1} parent=15 // pred_check_branch
        %240 = sbr.rel (%p238) target = $region32
      $region31: #{simple_retention_forward.1} parent=15 // pred_region
        %s241 = sld [smem:[#allocation5 + %s20]]
        %p242 = scmp.lt.s32.totalorder %s21, %s241
        %s243 = scalar_select %p242, %s21, %s241
        %p244 = scmp.lt.s32.totalorder %s19, 1
        %s245 = scalar_select %p244, %s19, 1
        %p246 = scmp.lt.s32.totalorder %s243, 0
        %s247 = scalar_select %p246, %s243, 0
        %s248 = sadd.s32 %s247, %s245
        %s249 = smul.addr %s248, 8
        %s250 = scalar_lea.vmem %s4, %s249
        %s251 = sld [smem:[#allocation5 + %s20]]
        %p252 = scmp.lt.s32.totalorder %s21, %s251
        %s253 = scalar_select %p252, %s21, %s251
      $region32: #{simple_retention_forward.1} parent=15 // pred_fallthru
        _
    $region16: #{simple_retention_forward.1} parent=5 // pred_fallthru
      _
    %p254 = scmp.le.s32.totalorder 1, %s12
    %p255 = scmp.lt.s32.totalorder %s12, 3
    %p256 = pnand %p254, %p255
    %p257 = pneg %p256
    // Predicated region
    $region33: #{simple_retention_forward.1} parent=5 // pred_check
      _
    $region34: #{simple_retention_forward.1} parent=5 // pred_check_branch
      %259 = sbr.rel (%p256) target = $region36
    $region35: #{simple_retention_forward.1} parent=5 // pred_region
      %s260 = ssub.s32 %s12, 1
      %p261 = scmp.lt.s32.totalorder %s22, 1
      %s262 = scalar_select %p261, %s22, 1
      %p263 = scmp.lt.s32.totalorder %s23, 0
      %s264 = scalar_select %p263, %s23, 0
      %s265 = sadd.s32 %s264, %s262
      %s266 = smul.addr %s265, 8
      %s267 = scalar_lea.vmem %s1, %s266
      %p268 = pneg %p59
      %p269 = pneg %p56
      %p270 = scmp.lt.s32.totalorder %s22, 1
      %s271 = scalar_select %p270, %s22, 1
      %p272 = scmp.lt.s32.totalorder %s23, 0
      %s273 = scalar_select %p272, %s23, 0
      %s274 = sadd.s32 %s273, %s271
      %s275 = smul.addr %s274, 8
      %s276 = scalar_lea.vmem %s2, %s275
      %p277 = pneg %p87
      %p278 = pneg %p84
      %s279 = sld [smem:[#allocation5 + %s23]]
      %p280 = scmp.lt.s32.totalorder %s24, %s279
      %s281 = scalar_select %p280, %s24, %s279
      %p282 = scmp.lt.s32.totalorder %s22, 1
      %s283 = scalar_select %p282, %s22, 1
      %p284 = scmp.lt.s32.totalorder %s281, 0
      %s285 = scalar_select %p284, %s281, 0
      %s286 = sadd.s32 %s285, %s283
      %s287 = smul.addr %s286, 8
      %s288 = scalar_lea.vmem %s3, %s287
      %p289 = pneg %p121
      %p290 = pneg %p118
      %s291 = sld [smem:[#allocation5 + %s23]]
      %p292 = scmp.lt.s32.totalorder %s24, %s291
      %s293 = scalar_select %p292, %s24, %s291
      %p294 = scmp.lt.s32.totalorder %s22, 1
      %s295 = scalar_select %p294, %s22, 1
      %p296 = scmp.lt.s32.totalorder %s293, 0
      %s297 = scalar_select %p296, %s293, 0
      %s298 = sadd.s32 %s297, %s295
      %s299 = smul.addr %s298, 8
      %s300 = scalar_lea.vmem %s4, %s299
      %p301 = pneg %p155
      %p302 = pneg %p152
      %p303 = pneg %p183
      %p304 = pneg %p180
      %p305 = scmp.lt.s32.totalorder %s22, 1
      %s306 = scalar_select %p305, %s22, 1
      %p307 = scmp.lt.s32.totalorder %s23, 0
      %s308 = scalar_select %p307, %s23, 0
      %s309 = sadd.s32 %s308, %s306
      %s310 = smul.addr %s309, 8
      %s311 = scalar_lea.vmem %s5, %s310
      %p312 = scmp.lt.s32.totalorder %s22, 1
      %s313 = scalar_select %p312, %s22, 1
      %p314 = scmp.lt.s32.totalorder %s23, 0
      %s315 = scalar_select %p314, %s23, 0
      %s316 = sadd.s32 %s315, %s313
      %s317 = smul.addr %s316, 8
      %s318 = scalar_lea.vmem %s1, %s317
      %p319 = scmp.lt.s32.totalorder %s22, 1
      %s320 = scalar_select %p319, %s22, 1
      %p321 = scmp.lt.s32.totalorder %s23, 0
      %s322 = scalar_select %p321, %s23, 0
      %s323 = sadd.s32 %s322, %s320
      %s324 = smul.addr %s323, 8
      %s325 = scalar_lea.vmem %s2, %s324
      %s326 = sld [smem:[#allocation5 + %s23]]
      %p327 = scmp.lt.s32.totalorder %s24, %s326
      %s328 = scalar_select %p327, %s24, %s326
      %p329 = scmp.lt.s32.totalorder %s22, 1
      %s330 = scalar_select %p329, %s22, 1
      %p331 = scmp.lt.s32.totalorder %s328, 0
      %s332 = scalar_select %p331, %s328, 0
      %s333 = sadd.s32 %s332, %s330
      %s334 = smul.addr %s333, 8
      %s335 = scalar_lea.vmem %s3, %s334
      %s336 = sld [smem:[#allocation5 + %s23]]
      %p337 = scmp.lt.s32.totalorder %s24, %s336
      %s338 = scalar_select %p337, %s24, %s336
      %s339 = sld [smem:[#allocation5 + %s23]]
      %p340 = scmp.lt.s32.totalorder %s24, %s339
      %s341 = scalar_select %p340, %s24, %s339
      %p342 = scmp.lt.s32.totalorder %s22, 1
      %s343 = scalar_select %p342, %s22, 1
      %p344 = scmp.lt.s32.totalorder %s341, 0
      %s345 = scalar_select %p344, %s341, 0
      %s346 = sadd.s32 %s345, %s343
      %s347 = smul.addr %s346, 8
      %s348 = scalar_lea.vmem %s4, %s347
      %s349 = sld [smem:[#allocation5 + %s23]]
      %p350 = scmp.lt.s32.totalorder %s24, %s349
      %s351 = scalar_select %p350, %s24, %s349
      %p352 = scmp.lt.s32.totalorder %s22, 1
      %s353 = scalar_select %p352, %s22, 1
      %p354 = scmp.lt.s32.totalorder %s23, 0
      %s355 = scalar_select %p354, %s23, 0
      %s356 = sadd.s32 %s355, %s353
      %s357 = smul.addr %s356, 8
      %s358 = scalar_lea.vmem %s5, %s357
      %p359 = scmp.eq.s32.totalorder %s24, 0
      // Predicated region
      $region37: #{simple_retention_forward.1} parent=35 // pred_check
        %p360 = pneg %p359
      $region38: #{simple_retention_forward.1} parent=35 // pred_check_branch
        %362 = sbr.rel (%p360) target = $region40
      $region39: #{simple_retention_forward.1} parent=35 // pred_region
        %vm363 = vcmask 261120
        %364 = vst.msk [vmem:[#allocation2] sm:$0xff] %vm363, 0.0
        %365 = vst.msk [vmem:[#allocation3] sm:$0xff] %vm363, 0.0
      $region40: #{simple_retention_forward.1} parent=35 // pred_fallthru
        _
      %s366 = sld [smem:[#allocation5 + %s23]]
      %p367 = scmp.le.s32.totalorder %s24, %s366
      // Predicated region
      $region41: #{simple_retention_forward.1} parent=35 // pred_check
        %p368 = pneg %p367
      $region42: #{simple_retention_forward.1} parent=35 // pred_check_branch
        %370 = sbr.rel (%p368) target = $region44
      $region43: #{simple_retention_forward.1} parent=35 // pred_region
        %v371 = vld [vmem:[%s318] sm:$0xff]
        %v372 = vld [vmem:[%s325] sm:$0xff]
        %v373 = vld [vmem:[%s335] sm:$0xff]
        %v374 = vld [vmem:[%s348] sm:$0xff]
        %vm375 = vcmask 523264
        %v377 = vsel %vm375, %v371, 0
        %v380 = vsel %vm375, %v373, 0
        %382 = vmatprep.subr.mxu0 0.0
        %383 = vmatpush1.xpose.msra.mxu0 %v380
        %384 = vmatprep.subr.mxu0 0.0
        %385 = vmatpush1.xpose.msra.mxu0 0.0
        %386 = vmatprep.subr.mxu0 0.0
        %387 = vmatpush1.xpose.msra.mxu0 0.0
        %388 = vmatprep.subr.mxu0 0.0
        %389 = vmatpush1.xpose.msra.mxu0 0.0
        %390 = vmatprep.subr.mxu0 0.0
        %391 = vmatpush1.xpose.msra.mxu0 0.0
        %392 = vmatprep.subr.mxu0 0.0
        %393 = vmatpush1.xpose.msra.mxu0 0.0
        %394 = vmatprep.subr.mxu0 0.0
        %395 = vmatpush1.xpose.msra.mxu0 0.0
        %396 = vmatprep.subr.mxu0 0.0
        %397 = vmatpush1.xpose.msra.mxu0 0.0
        %398 = vmatprep.subr.mxu0 0.0
        %399 = vmatpush1.xpose.msra.mxu0 0.0
        %400 = vmatprep.subr.mxu0 0.0
        %401 = vmatpush1.xpose.msra.mxu0 0.0
        %402 = vmatprep.subr.mxu0 0.0
        %403 = vmatpush1.xpose.msra.mxu0 0.0
        %404 = vmatprep.subr.mxu0 0.0
        %405 = vmatpush1.xpose.msra.mxu0 0.0
        %406 = vmatprep.subr.mxu0 0.0
        %407 = vmatpush1.xpose.msra.mxu0 0.0
        %408 = vmatprep.subr.mxu0 0.0
        %409 = vmatpush1.xpose.msra.mxu0 0.0
        %410 = vmatprep.subr.mxu0 0.0
        %411 = vmatpush1.xpose.msra.mxu0 0.0
        %412 = vmatprep.subr.mxu0 0.0
        %413 = vmatpush1.xpose.msra.mxu0 0.0
        %414 = vmatprep.subr.mxu0 0.0
        %415 = vmatpush1.xpose.msra.mxu0 0.0
        %416 = vmatprep.subr.mxu0 0.0
        %417 = vmatpush1.xpose.msra.mxu0 0.0
        %418 = vmatprep.subr.mxu0 0.0
        %419 = vmatpush1.xpose.msra.mxu0 0.0
        %420 = vmatprep.subr.mxu0 0.0
        %421 = vmatpush1.xpose.msra.mxu0 0.0
        %422 = vmatprep.subr.mxu0 0.0
        %423 = vmatpush1.xpose.msra.mxu0 0.0
        %424 = vmatprep.subr.mxu0 0.0
        %425 = vmatpush1.xpose.msra.mxu0 0.0
        %426 = vmatprep.subr.mxu0 0.0
        %427 = vmatpush1.xpose.msra.mxu0 0.0
        %428 = vmatprep.subr.mxu0 0.0
        %429 = vmatpush1.xpose.msra.mxu0 0.0
        %430 = vmatprep.subr.mxu0 0.0
        %431 = vmatpush1.xpose.msra.mxu0 0.0
        %432 = vmatprep.subr.mxu0 0.0
        %433 = vmatpush1.xpose.msra.mxu0 0.0
        %434 = vmatprep.subr.mxu0 0.0
        %435 = vmatpush1.xpose.msra.mxu0 0.0
        %436 = vmatprep.subr.mxu0 0.0
        %437 = vmatpush1.xpose.msra.mxu0 0.0
        %438 = vmatprep.subr.mxu0 0.0
        %439 = vmatpush1.xpose.msra.mxu0 0.0
        %440 = vmatprep.subr.mxu0 0.0
        %441 = vmatpush1.xpose.msra.mxu0 0.0
        %442 = vmatprep.subr.mxu0 0.0
        %443 = vmatpush1.xpose.msra.mxu0 0.0
        %444 = vmatprep.subr.mxu0 0.0
        %445 = vmatpush1.xpose.msra.mxu0 0.0
        %446 = vmatprep.mubr.f32.mxu0 0.0
        %447 = vmatmul.mubr.f32.gmra.mrb[0].mxu0 %v377
        %v448 = vpop.f32.mrb[0].mxu0
        %v449 = vadd.f32 0.0, %v448
        %v450 = vpop.f32.mrb[0].mxu0
        %451 = vdwg.mxu0
        %v453 = vsel %vm375, %v372, 0
        %455 = vmatprep.subr.mxu0 0.0
        %456 = vmatpush1.xpose.msra.mxu0 %v380
        %457 = vmatprep.subr.mxu0 0.0
        %458 = vmatpush1.xpose.msra.mxu0 0.0
        %459 = vmatprep.subr.mxu0 0.0
        %460 = vmatpush1.xpose.msra.mxu0 0.0
        %461 = vmatprep.subr.mxu0 0.0
        %462 = vmatpush1.xpose.msra.mxu0 0.0
        %463 = vmatprep.subr.mxu0 0.0
        %464 = vmatpush1.xpose.msra.mxu0 0.0
        %465 = vmatprep.subr.mxu0 0.0
        %466 = vmatpush1.xpose.msra.mxu0 0.0
        %467 = vmatprep.subr.mxu0 0.0
        %468 = vmatpush1.xpose.msra.mxu0 0.0
        %469 = vmatprep.subr.mxu0 0.0
        %470 = vmatpush1.xpose.msra.mxu0 0.0
        %471 = vmatprep.subr.mxu0 0.0
        %472 = vmatpush1.xpose.msra.mxu0 0.0
        %473 = vmatprep.subr.mxu0 0.0
        %474 = vmatpush1.xpose.msra.mxu0 0.0
        %475 = vmatprep.subr.mxu0 0.0
        %476 = vmatpush1.xpose.msra.mxu0 0.0
        %477 = vmatprep.subr.mxu0 0.0
        %478 = vmatpush1.xpose.msra.mxu0 0.0
        %479 = vmatprep.subr.mxu0 0.0
        %480 = vmatpush1.xpose.msra.mxu0 0.0
        %481 = vmatprep.subr.mxu0 0.0
        %482 = vmatpush1.xpose.msra.mxu0 0.0
        %483 = vmatprep.subr.mxu0 0.0
        %484 = vmatpush1.xpose.msra.mxu0 0.0
        %485 = vmatprep.subr.mxu0 0.0
        %486 = vmatpush1.xpose.msra.mxu0 0.0
        %487 = vmatprep.subr.mxu0 0.0
        %488 = vmatpush1.xpose.msra.mxu0 0.0
        %489 = vmatprep.subr.mxu0 0.0
        %490 = vmatpush1.xpose.msra.mxu0 0.0
        %491 = vmatprep.subr.mxu0 0.0
        %492 = vmatpush1.xpose.msra.mxu0 0.0
        %493 = vmatprep.subr.mxu0 0.0
        %494 = vmatpush1.xpose.msra.mxu0 0.0
        %495 = vmatprep.subr.mxu0 0.0
        %496 = vmatpush1.xpose.msra.mxu0 0.0
        %497 = vmatprep.subr.mxu0 0.0
        %498 = vmatpush1.xpose.msra.mxu0 0.0
        %499 = vmatprep.subr.mxu0 0.0
        %500 = vmatpush1.xpose.msra.mxu0 0.0
        %501 = vmatprep.subr.mxu0 0.0
        %502 = vmatpush1.xpose.msra.mxu0 0.0
        %503 = vmatprep.subr.mxu0 0.0
        %504 = vmatpush1.xpose.msra.mxu0 0.0
        %505 = vmatprep.subr.mxu0 0.0
        %506 = vmatpush1.xpose.msra.mxu0 0.0
        %507 = vmatprep.subr.mxu0 0.0
        %508 = vmatpush1.xpose.msra.mxu0 0.0
        %509 = vmatprep.subr.mxu0 0.0
        %510 = vmatpush1.xpose.msra.mxu0 0.0
        %511 = vmatprep.subr.mxu0 0.0
        %512 = vmatpush1.xpose.msra.mxu0 0.0
        %513 = vmatprep.subr.mxu0 0.0
        %514 = vmatpush1.xpose.msra.mxu0 0.0
        %515 = vmatprep.subr.mxu0 0.0
        %516 = vmatpush1.xpose.msra.mxu0 0.0
        %517 = vmatprep.subr.mxu0 0.0
        %518 = vmatpush1.xpose.msra.mxu0 0.0
        %519 = vmatprep.mubr.f32.mxu0 0.0
        %520 = vmatmul.mubr.f32.gmra.mrb[0].mxu0 %v453
        %v521 = vpop.f32.mrb[0].mxu0
        %v522 = vadd.f32 0.0, %v521
        %v523 = vpop.f32.mrb[0].mxu0
        %524 = vdwg.mxu0
        %v525 = vlaneseq
        %v526 = vshrl.u32 %v525, 7
        %v527 = vlaneseq
        %v528 = vand.u32 %v527, 127
        %s529 = smul.u32 %s23, 8
        %s530 = smul.u32 %s24, 8
        %s531 = ssub.s32 %s529, %s530
        %v532 = vstv %s531
        %v533 = vadd.s32 %v532, %v526
        %v534 = vsub.s32 %v533, %v528
        %vm535 = vcmp.ge.s32.totalorder %v534, 0
        %v536 = vsel %vm535, %v534, 0
        %v537 = vcvt.s32.f32 %v536
        %v538 = vmul.f32 %v537, -0.105360515
        %v539 = vmul.f32 %v538, 1.442695
        %v540 = vpow.pop %v539
        %v541 = vsel %vm535, %v540, 0.0
        %v542 = vld [vmem:[#allocation2] sm:$0xff]
        %v543 = vmul.f32 %v449, %v541
        %vm544 = vcmask 64512
        %v546 = vsel %vm544, %v543, 0
        %548 = vmatprep.subr.mxu0 0.0
        %549 = vmatpush1.msra.mxu0 %v374
        %550 = vmatprep.subr.mxu0 0.0
        %551 = vmatpush1.msra.mxu0 0.0
        %552 = vmatprep.subr.mxu0 0.0
        %553 = vmatpush1.msra.mxu0 0.0
        %554 = vmatprep.subr.mxu0 0.0
        %555 = vmatpush1.msra.mxu0 0.0
        %556 = vmatprep.subr.mxu0 0.0
        %557 = vmatpush1.msra.mxu0 0.0
        %558 = vmatprep.subr.mxu0 0.0
        %559 = vmatpush1.msra.mxu0 0.0
        %560 = vmatprep.subr.mxu0 0.0
        %561 = vmatpush1.msra.mxu0 0.0
        %562 = vmatprep.subr.mxu0 0.0
        %563 = vmatpush1.msra.mxu0 0.0
        %564 = vmatprep.subr.mxu0 0.0
        %565 = vmatpush1.msra.mxu0 0.0
        %566 = vmatprep.subr.mxu0 0.0
        %567 = vmatpush1.msra.mxu0 0.0
        %568 = vmatprep.subr.mxu0 0.0
        %569 = vmatpush1.msra.mxu0 0.0
        %570 = vmatprep.subr.mxu0 0.0
        %571 = vmatpush1.msra.mxu0 0.0
        %572 = vmatprep.subr.mxu0 0.0
        %573 = vmatpush1.msra.mxu0 0.0
        %574 = vmatprep.subr.mxu0 0.0
        %575 = vmatpush1.msra.mxu0 0.0
        %576 = vmatprep.subr.mxu0 0.0
        %577 = vmatpush1.msra.mxu0 0.0
        %578 = vmatprep.subr.mxu0 0.0
        %579 = vmatpush1.msra.mxu0 0.0
        %580 = vmatprep.subr.mxu0 0.0
        %581 = vmatpush1.msra.mxu0 0.0
        %582 = vmatprep.subr.mxu0 0.0
        %583 = vmatpush1.msra.mxu0 0.0
        %584 = vmatprep.subr.mxu0 0.0
        %585 = vmatpush1.msra.mxu0 0.0
        %586 = vmatprep.subr.mxu0 0.0
        %587 = vmatpush1.msra.mxu0 0.0
        %588 = vmatprep.subr.mxu0 0.0
        %589 = vmatpush1.msra.mxu0 0.0
        %590 = vmatprep.subr.mxu0 0.0
        %591 = vmatpush1.msra.mxu0 0.0
        %592 = vmatprep.subr.mxu0 0.0
        %593 = vmatpush1.msra.mxu0 0.0
        %594 = vmatprep.subr.mxu0 0.0
        %595 = vmatpush1.msra.mxu0 0.0
        %596 = vmatprep.subr.mxu0 0.0
        %597 = vmatpush1.msra.mxu0 0.0
        %598 = vmatprep.subr.mxu0 0.0
        %599 = vmatpush1.msra.mxu0 0.0
        %600 = vmatprep.subr.mxu0 0.0
        %601 = vmatpush1.msra.mxu0 0.0
        %602 = vmatprep.subr.mxu0 0.0
        %603 = vmatpush1.msra.mxu0 0.0
        %604 = vmatprep.subr.mxu0 0.0
        %605 = vmatpush1.msra.mxu0 0.0
        %606 = vmatprep.subr.mxu0 0.0
        %607 = vmatpush1.msra.mxu0 0.0
        %608 = vmatprep.subr.mxu0 0.0
        %609 = vmatpush1.msra.mxu0 0.0
        %610 = vmatprep.subr.mxu0 0.0
        %611 = vmatpush1.msra.mxu0 0.0
        %612 = vmatprep.mubr.f32.mxu0 0.0
        %613 = vmatmul.mubr.f32.gmra.mrb[0].mxu0 %v546
        %v614 = vpop.f32.mrb[0].mxu0
        %v615 = vadd.f32 0.0, %v614
        %v616 = vpop.f32.mrb[0].mxu0
        %617 = vdwg.mxu0
        %v618 = vadd.f32 %v542, %v615
        %vm619 = vcmask 261120
        %620 = vst.msk [vmem:[#allocation2] sm:$0xff] %vm619, %v618
        %v621 = vld [vmem:[#allocation3] sm:$0xff]
        %v622 = vmul.f32 %v522, %v541
        %v624 = vsel %vm544, %v622, 0
        %626 = vmatprep.subr.mxu0 0.0
        %627 = vmatpush1.msra.mxu0 %v374
        %628 = vmatprep.subr.mxu0 0.0
        %629 = vmatpush1.msra.mxu0 0.0
        %630 = vmatprep.subr.mxu0 0.0
        %631 = vmatpush1.msra.mxu0 0.0
        %632 = vmatprep.subr.mxu0 0.0
        %633 = vmatpush1.msra.mxu0 0.0
        %634 = vmatprep.subr.mxu0 0.0
        %635 = vmatpush1.msra.mxu0 0.0
        %636 = vmatprep.subr.mxu0 0.0
        %637 = vmatpush1.msra.mxu0 0.0
        %638 = vmatprep.subr.mxu0 0.0
        %639 = vmatpush1.msra.mxu0 0.0
        %640 = vmatprep.subr.mxu0 0.0
        %641 = vmatpush1.msra.mxu0 0.0
        %642 = vmatprep.subr.mxu0 0.0
        %643 = vmatpush1.msra.mxu0 0.0
        %644 = vmatprep.subr.mxu0 0.0
        %645 = vmatpush1.msra.mxu0 0.0
        %646 = vmatprep.subr.mxu0 0.0
        %647 = vmatpush1.msra.mxu0 0.0
        %648 = vmatprep.subr.mxu0 0.0
        %649 = vmatpush1.msra.mxu0 0.0
        %650 = vmatprep.subr.mxu0 0.0
        %651 = vmatpush1.msra.mxu0 0.0
        %652 = vmatprep.subr.mxu0 0.0
        %653 = vmatpush1.msra.mxu0 0.0
        %654 = vmatprep.subr.mxu0 0.0
        %655 = vmatpush1.msra.mxu0 0.0
        %656 = vmatprep.subr.mxu0 0.0
        %657 = vmatpush1.msra.mxu0 0.0
        %658 = vmatprep.subr.mxu0 0.0
        %659 = vmatpush1.msra.mxu0 0.0
        %660 = vmatprep.subr.mxu0 0.0
        %661 = vmatpush1.msra.mxu0 0.0
        %662 = vmatprep.subr.mxu0 0.0
        %663 = vmatpush1.msra.mxu0 0.0
        %664 = vmatprep.subr.mxu0 0.0
        %665 = vmatpush1.msra.mxu0 0.0
        %666 = vmatprep.subr.mxu0 0.0
        %667 = vmatpush1.msra.mxu0 0.0
        %668 = vmatprep.subr.mxu0 0.0
        %669 = vmatpush1.msra.mxu0 0.0
        %670 = vmatprep.subr.mxu0 0.0
        %671 = vmatpush1.msra.mxu0 0.0
        %672 = vmatprep.subr.mxu0 0.0
        %673 = vmatpush1.msra.mxu0 0.0
        %674 = vmatprep.subr.mxu0 0.0
        %675 = vmatpush1.msra.mxu0 0.0
        %676 = vmatprep.subr.mxu0 0.0
        %677 = vmatpush1.msra.mxu0 0.0
        %678 = vmatprep.subr.mxu0 0.0
        %679 = vmatpush1.msra.mxu0 0.0
        %680 = vmatprep.subr.mxu0 0.0
        %681 = vmatpush1.msra.mxu0 0.0
        %682 = vmatprep.subr.mxu0 0.0
        %683 = vmatpush1.msra.mxu0 0.0
        %684 = vmatprep.subr.mxu0 0.0
        %685 = vmatpush1.msra.mxu0 0.0
        %686 = vmatprep.subr.mxu0 0.0
        %687 = vmatpush1.msra.mxu0 0.0
        %688 = vmatprep.subr.mxu0 0.0
        %689 = vmatpush1.msra.mxu0 0.0
        %690 = vmatprep.mubr.f32.mxu0 0.0
        %691 = vmatmul.mubr.f32.gmra.mrb[0].mxu0 %v624
        %v692 = vpop.f32.mrb[0].mxu0
        %v693 = vadd.f32 0.0, %v692
        %v694 = vpop.f32.mrb[0].mxu0
        %695 = vdwg.mxu0
        %v696 = vadd.f32 %v621, %v693
        %697 = vst.msk [vmem:[#allocation3] sm:$0xff] %vm619, %v696
      $region44: #{simple_retention_forward.1} parent=35 // pred_fallthru
        _
      // Predicated region
      $region45: #{simple_retention_forward.1} parent=35 // pred_check
        %p698 = pneg %p359
      $region46: #{simple_retention_forward.1} parent=35 // pred_check_branch
        %700 = sbr.rel (%p698) target = $region48
      $region47: #{simple_retention_forward.1} parent=35 // pred_region
        %v701 = vld [vmem:[#allocation2] sm:$0xff]
        %v702 = vld [vmem:[#allocation3] sm:$0xff]
        %704 = vrot.lane.b32.xlu0 %v702, 32
        %v705 = vpop.permute.xlu0 %704
        %vm707 = vcmask 261120
        %v708 = vsel %vm707, %v701, %v705
        %vm709 = vcmask 523264
        %710 = vst.msk [vmem:[%s358] sm:$0xff] %vm709, %v708
      $region48: #{simple_retention_forward.1} parent=35 // pred_fallthru
        _
      %p711 = scmp.lt.s32.totalorder %s22, 1
      %s712 = scalar_select %p711, %s22, 1
      %p713 = scmp.lt.s32.totalorder %s23, 0
      %s714 = scalar_select %p713, %s23, 0
      %s715 = sadd.s32 %s714, %s712
      %s716 = smul.addr %s715, 8
      %s717 = scalar_lea.vmem %s5, %s716
      // Predicated region
      $region49: #{simple_retention_forward.1} parent=35 // pred_check
        %p718 = pneg %p180
      $region50: #{simple_retention_forward.1} parent=35 // pred_check_branch
        %720 = sbr.rel (%p718) target = $region52
      $region51: #{simple_retention_forward.1} parent=35 // pred_region
        _
      $region52: #{simple_retention_forward.1} parent=35 // pred_fallthru
        _
    $region36: #{simple_retention_forward.1} parent=5 // pred_fallthru
      _
    %p721 = scmp.le.s32.totalorder 2, %s12
    // Predicated region
    $region53: #{simple_retention_forward.1} parent=5 // pred_check
      %p722 = pneg %p721
    $region54: #{simple_retention_forward.1} parent=5 // pred_check_branch
      %724 = sbr.rel (%p722) target = $region56
    $region55: #{simple_retention_forward.1} parent=5 // pred_region
      %s725 = ssub.s32 %s12, 2
      // Predicated region
      $region57: #{simple_retention_forward.1} parent=55 // pred_check
        %p726 = pneg %p186
      $region58: #{simple_retention_forward.1} parent=55 // pred_check_branch
        %728 = sbr.rel (%p726) target = $region60
      $region59: #{simple_retention_forward.1} parent=55 // pred_region
        %p729 = scmp.lt.s32.totalorder %s25, 1
        %s730 = scalar_select %p729, %s25, 1
        %p731 = scmp.lt.s32.totalorder %s26, 0
        %s732 = scalar_select %p731, %s26, 0
        %s733 = sadd.s32 %s732, %s730
        %s734 = smul.addr %s733, 8
        %s735 = scalar_lea.vmem %s5, %s734
      $region60: #{simple_retention_forward.1} parent=55 // pred_fallthru
        _
    $region56: #{simple_retention_forward.1} parent=5 // pred_fallthru
      _
  $region6: #{simple_retention_forward.1} parent=0 // loop_footer
    %s16 = sadd.s32 1, %s12
  $region7: #{simple_retention_forward.1} parent=0 // loop_footer_branch
    %11 = sbr.rel target = $region3
  $region8: #{simple_retention_forward.1} parent=0 // loop_exit
    _

</llo_original>
